<compile_context>
chip_gen: v7x
topology: tpu7x:2x2x1
jax: 0.10.0
libtpu: 0.0.40
codegen_flags: <defaults>
</compile_context>

<pallas_src>
import functools

import jax
import jax.numpy as jnp
from jax import lax
from jax.experimental import pallas as pl
from jax.experimental.pallas import tpu as pltpu


def _round_up(a, b):
    return (a + b - 1) // b * b


# ----------------------------------------------------------------------------
# Fused kernel: one row-tile of all three VectorQuantizers.
#
#   x_ref    : (TR, 3D) f32   rows of h_wt (type | angle | coord features)
#   wbf_ref  : (3K, 3D) bf16  block-diagonal, pre-normalized codebooks
#   wf_ref   : (3K, 3D) f32   same, f32 (for the exact gather)
#   mask_ref : (TR, 1)  f32   1.0 where the token participates in the loss
#   q_ref    : (TR, 3D) f32   quantized (straight-through forward value)
#   stats_ref: (8, 128) f32   per-tile partials: [0,0]=sum masked ||q-xn||^2,
#                             [0,1]=masked row count, rest zero
# ----------------------------------------------------------------------------
def _fused_vq3_kernel(x_ref, wbf_ref, wf_ref, mask_ref, q_ref, stats_ref):
    x = x_ref[...].astype(jnp.float32)                    # (TR, 3D)
    m = mask_ref[...].astype(jnp.float32)                 # (TR, 1)
    wbf = wbf_ref[...]                                    # (3K, 3D) bf16
    wf = wf_ref[...]                                      # (3K, 3D) f32

    D = x.shape[-1] // 3
    K = wbf.shape[0] // 3

    # Per-segment L2 normalisation == F.normalize(x, p=2, dim=-1) on each D-slice.
    # rsqrt(max(ssq, eps^2)) == x / max(||x||, eps) with eps = 1e-12.
    xn_parts = []
    for s in range(3):
        xs = x[:, s * D:(s + 1) * D]
        ssq = jnp.sum(xs * xs, axis=-1, keepdims=True)
        xn_parts.append(xs * lax.rsqrt(jnp.maximum(ssq, 1e-24)))
    xn = jnp.concatenate(xn_parts, axis=-1)               # (TR, 3D)

    # Cosine scores against the block-diagonal normalized codebook.
    # ||xn||^2 and ||wn||^2 are constants, so argmin(dist) == argmax(scores).
    scores = lax.dot_general(
        xn.astype(jnp.bfloat16), wbf,
        (((1,), (1,)), ((), ())),
        preferred_element_type=jnp.float32)               # (TR, 3K)

    # Per-segment argmax (first occurrence on ties, matching torch.argmin).
    oh_parts = []
    for s in range(3):
        sc = scores[:, s * K:(s + 1) * K]                 # (TR, K)
        iota = lax.broadcasted_iota(jnp.int32, sc.shape, 1)
        mx = jnp.max(sc, axis=-1, keepdims=True)
        idx = jnp.min(jnp.where(sc >= mx, iota, K), axis=-1, keepdims=True)
        oh_parts.append((iota == idx).astype(jnp.float32))
    onehot = jnp.concatenate(oh_parts, axis=-1)           # (TR, 3K)

    # quantize(): gather + renormalize == one-hot matmul against the normalized
    # table (f32 so outputs are exactly the normalized codebook rows).
    q = lax.dot_general(onehot, wf, (((1,), (0,)), ((), ())),
                        preferred_element_type=jnp.float32)   # (TR, 3D)

    # straight-through: forward value of xn + (q - xn).detach() is just q
    q_ref[...] = q.astype(q_ref.dtype)

    # Masked squared error summed over all three segments (per-layer losses
    # share the same mask count and D, so the sum is all we need).
    diff = q - xn
    err = jnp.sum(diff * diff * m)
    cnt = jnp.sum(m)

    rows = lax.broadcasted_iota(jnp.int32, (8, 128), 0)
    lanes = lax.broadcasted_iota(jnp.int32, (8, 128), 1)
    stats_ref[...] = jnp.where(
        jnp.logical_and(rows == 0, lanes == 0), err,
        jnp.where(jnp.logical_and(rows == 0, lanes == 1), cnt, 0.0))


def fused_vq3_forward(h_wt, mask, emb_type, emb_angle, emb_coord,
                      commitment_cost, *, block_rows=256):
    """All three VectorQuantizer.forward passes in one pallas_call.

    h_wt       : (N, L, 3D) float32
    mask       : (N, L)     bool
    emb_*      : (K, D)     float32 (nn.Embedding weights)
    returns ((e_type, e_angle, e_coord), e_q_loss)
    """
    N, L, D3 = h_wt.shape
    D = D3 // 3
    K = emb_type.shape[0]
    R = N * L

    def _norm(w):
        w = w.astype(jnp.float32)
        return w * lax.rsqrt(jnp.maximum(jnp.sum(w * w, -1, keepdims=True), 1e-24))

    # Normalize the codebooks once (not per grid step) and lay them out
    # block-diagonally so one matmul / one lane-dense output serves all three.
    wbd = jnp.zeros((3 * K, 3 * D), jnp.float32)
    wbd = wbd.at[0 * K:1 * K, 0 * D:1 * D].set(_norm(emb_type))
    wbd = wbd.at[1 * K:2 * K, 1 * D:2 * D].set(_norm(emb_angle))
    wbd = wbd.at[2 * K:3 * K, 2 * D:3 * D].set(_norm(emb_coord))
    wbd_bf = wbd.astype(jnp.bfloat16)

    x2 = h_wt.reshape(R, D3).astype(jnp.float32)
    m2 = mask.reshape(R, 1).astype(jnp.float32)

    # Row tiling: TR multiple of 8; pad R (padded rows have mask == 0 so they
    # contribute nothing to err/cnt and are sliced away afterwards).
    TR = min(block_rows, _round_up(R, 8))
    Rp = _round_up(R, TR)
    if Rp != R:
        x2 = jnp.pad(x2, ((0, Rp - R), (0, 0)))
        m2 = jnp.pad(m2, ((0, Rp - R), (0, 0)))
    G = Rp // TR

    cost = pl.CostEstimate(
        flops=4 * Rp * (3 * K) * (3 * D),          # scores + gather matmuls
        transcendentals=3 * Rp,                    # per-row, per-segment rsqrt
        bytes_accessed=(4 * Rp * D3 * 2            # x in, q out
                        + 6 * (3 * K) * (3 * D)    # bf16 + f32 codebooks
                        + 4 * Rp                   # mask
                        + 4 * G * 8 * 128))        # stats

    q, stats = pl.pallas_call(
        _fused_vq3_kernel,
        grid=(G,),
        in_specs=[
            pl.BlockSpec((TR, D3), lambda i: (i, 0)),        # x: streamed
            pl.BlockSpec((3 * K, D3), lambda i: (0, 0)),     # bf16 codebook: resident
            pl.BlockSpec((3 * K, D3), lambda i: (0, 0)),     # f32 codebook: resident
            pl.BlockSpec((TR, 1), lambda i: (i, 0)),         # mask: streamed
        ],
        out_specs=(
            pl.BlockSpec((TR, D3), lambda i: (i, 0)),        # quantized slab
            pl.BlockSpec((8, 128), lambda i: (i, 0)),        # per-tile partial sums
        ),
        out_shape=(
            jax.ShapeDtypeStruct((Rp, D3), jnp.float32),
            jax.ShapeDtypeStruct((G * 8, 128), jnp.float32),
        ),
        compiler_params=pltpu.CompilerParams(
            dimension_semantics=("parallel",),               # grid can shard over TCs
            vmem_limit_bytes=32 * 1024 * 1024),
        cost_estimate=cost,
    )(x2, wbd_bf, wbd, m2)

    # loss = sum over the three layers of (q_latent + cc * e_latent)
    #      = (1 + cc) * (err_type + err_angle + err_coord) / (cnt * D)
    err = jnp.sum(stats[:, 0])
    cnt = jnp.sum(stats[:, 1])
    mse = err / (jnp.maximum(cnt, 1.0) * D)   # clamp avoids NaN on an all-masked batch
    e_q_loss = (1.0 + commitment_cost) * mse

    q = q[:R].reshape(N, L, D3)
    e_type = q[:, :, 0 * D:1 * D]
    e_angle = q[:, :, 1 * D:2 * D]
    e_coord = q[:, :, 2 * D:3 * D]
    return (e_type, e_angle, e_coord), e_q_loss


# ----------------------------------------------------------------------------
# Codebook: the VQ portion of Codebook.forward / forward_encoder.
# TODO(synk): PerResidueEncoder / ResiduePairEncoder / GAEncoder / GADecoder and
#             the reconstruction losses are not defined in the provided source,
#             so h_wt is taken as an input instead of being produced in-script.
# ----------------------------------------------------------------------------
@functools.partial(jax.jit, static_argnames=("node_feat_dim", "commitment_cost"))
def codebook_vq_forward(h_wt, mask_atoms, emb_type, emb_angle, emb_coord,
                        *, node_feat_dim, commitment_cost):
    assert h_wt.shape[-1] == 3 * node_feat_dim
    mask = mask_atoms[:, :, 1]          # CA-atom mask used by all three VQ layers
    return fused_vq3_forward(h_wt, mask, emb_type, emb_angle, emb_coord,
                             commitment_cost)


# ----------------------------------------------------------------------------
# Pure-JAX reference of a single VectorQuantizer.forward (for the self-test).
# ----------------------------------------------------------------------------
def _vq_reference(x, w, mask, commitment_cost):
    eps = 1e-12
    xn = x / jnp.maximum(jnp.linalg.norm(x, axis=-1, keepdims=True), eps)
    wn = w / jnp.maximum(jnp.linalg.norm(w, axis=-1, keepdims=True), eps)
    d = (jnp.sum(xn ** 2, -1, keepdims=True)
         + jnp.sum(wn ** 2, -1)[None, None, :]
         - 2.0 * jnp.einsum('nld,kd->nlk', xn, wn))
    idx = jnp.argmin(d, axis=-1)
    q = wn[idx]
    m = mask.astype(jnp.float32)
    diff2 = jnp.sum((q - xn) ** 2, axis=-1)
    mse = jnp.sum(diff2 * m) / (jnp.maximum(jnp.sum(m), 1.0) * x.shape[-1])
    return q, (1.0 + commitment_cost) * mse


if __name__ == "__main__":
    # Small, deterministic configuration consistent with the module's __init__.
    N, L = 2, 16
    node_feat_dim = 32          # args.node_feat_dim
    num_embeddings = 64         # args.num_embeddings
    commitment_cost = 0.25      # args.commitment_cost
    D = node_feat_dim

    key = jax.random.PRNGKey(0)
    k_h, k_m, k_e0, k_e1, k_e2 = jax.random.split(key, 5)

    # Encoder output stand-in (see TODO above) and atom mask.
    h_wt = jax.random.normal(k_h, (N, L, 3 * D), jnp.float32)
    mask_atoms = jax.random.uniform(k_m, (N, L, 3)) > 0.3

    # nn.Embedding default init is N(0, 1): deterministic synthetic weights.
    emb_type = jax.random.normal(k_e0, (num_embeddings, D), jnp.float32)
    emb_angle = jax.random.normal(k_e1, (num_embeddings, D), jnp.float32)
    emb_coord = jax.random.normal(k_e2, (num_embeddings, D), jnp.float32)

    (e_type, e_angle, e_coord), e_q_loss = codebook_vq_forward(
        h_wt, mask_atoms, emb_type, emb_angle, emb_coord,
        node_feat_dim=node_feat_dim, commitment_cost=commitment_cost)
    jax.block_until_ready((e_type, e_angle, e_coord, e_q_loss))

    assert e_type.shape == (N, L, D)
    assert e_angle.shape == (N, L, D)
    assert e_coord.shape == (N, L, D)
    assert e_q_loss.shape == ()
    assert bool(jnp.isfinite(e_q_loss))
    # Quantized outputs are rows of the L2-normalized codebooks -> unit norm.
    assert bool(jnp.allclose(jnp.linalg.norm(e_type, axis=-1), 1.0, atol=1e-4))

    # Pure-JAX reference (f32 scores). The kernel's bf16 score matmul can in
    # principle flip near-tied code picks, so loss uses a loose tolerance and
    # the per-row check only requires membership in the normalized codebook.
    mask = mask_atoms[:, :, 1]
    embs = [emb_type, emb_angle, emb_coord]
    outs = [e_type, e_angle, e_coord]
    refs = [_vq_reference(h_wt[:, :, s * D:(s + 1) * D], embs[s], mask,
                          commitment_cost) for s in range(3)]
    ref_loss = refs[0][1] + refs[1][1] + refs[2][1]
    assert bool(jnp.allclose(e_q_loss, ref_loss, rtol=2e-2, atol=1e-3)), \
        (float(e_q_loss), float(ref_loss))

    match_fracs = []
    for (rq, _), q_out, emb in zip(refs, outs, embs):
        wn = emb / jnp.maximum(jnp.linalg.norm(emb, axis=-1, keepdims=True), 1e-12)
        dmin = jnp.min(jnp.sum((q_out[:, :, None, :] - wn[None, None]) ** 2, -1), -1)
        assert bool(jnp.max(dmin) < 1e-4)   # every row is a normalized codebook row
        match_fracs.append(
            jnp.mean((jnp.max(jnp.abs(q_out - rq), axis=-1) < 1e-3).astype(jnp.float32)))
    assert float((match_fracs[0] + match_fracs[1] + match_fracs[2]) / 3.0) >= 0.9

    print("KERNEL_OK")
</pallas_src>

<mosaic_0001>
module attributes {stable_mosaic.version = 11 : i64} {
  func.func @_fused_vq3_kernel(%arg0: i32, %arg1: memref<32x96xf32, #tpu.memory_space<vmem>>, %arg2: memref<192x96xbf16, #tpu.memory_space<vmem>>, %arg3: memref<192x96xf32, #tpu.memory_space<vmem>>, %arg4: memref<32x1xf32, #tpu.memory_space<vmem>>, %arg5: memref<32x96xf32, #tpu.memory_space<vmem>>, %arg6: memref<8x128xf32, #tpu.memory_space<vmem>>) attributes {dimension_semantics = [#tpu.dimension_semantics<parallel>], iteration_bounds = array<i64: 1>, scalar_prefetch = 0 : i64, scratch_operands = 0 : i64, tpu.core_type = #tpu.core_type<tc>, window_params = [{transform_indices = @transform_0, window_bounds = array<i64: 32, 96>}, {pipeline_mode = #tpu.pipeline_mode<synchronous>, transform_indices = @transform_1, window_bounds = array<i64: 192, 96>}, {pipeline_mode = #tpu.pipeline_mode<synchronous>, transform_indices = @transform_2, window_bounds = array<i64: 192, 96>}, {transform_indices = @transform_3, window_bounds = array<i64: 32, 1>}, {transform_indices = @transform_4, window_bounds = array<i64: 32, 96>}, {transform_indices = @transform_5, window_bounds = array<i64: 8, 128>}]} {
    %c0 = arith.constant 0 : index
    %c0_0 = arith.constant 0 : index
    %0 = vector.load %arg1[%c0, %c0_0] : memref<32x96xf32, #tpu.memory_space<vmem>>, vector<32x96xf32>
    %c0_1 = arith.constant 0 : index
    %c0_2 = arith.constant 0 : index
    %1 = vector.load %arg4[%c0_1, %c0_2] : memref<32x1xf32, #tpu.memory_space<vmem>>, vector<32x1xf32>
    %c0_3 = arith.constant 0 : index
    %c0_4 = arith.constant 0 : index
    %2 = vector.load %arg2[%c0_3, %c0_4] : memref<192x96xbf16, #tpu.memory_space<vmem>>, vector<192x96xbf16>
    %c0_5 = arith.constant 0 : index
    %c0_6 = arith.constant 0 : index
    %3 = vector.load %arg3[%c0_5, %c0_6] : memref<192x96xf32, #tpu.memory_space<vmem>>, vector<192x96xf32>
    %4 = vector.extract_strided_slice %0 {offsets = [0, 0], sizes = [32, 32], strides = [1, 1]} : vector<32x96xf32> to vector<32x32xf32>
    %5 = arith.mulf %4, %4 : vector<32x32xf32>
    %cst = arith.constant dense<0.000000e+00> : vector<32xf32>
    %6 = vector.multi_reduction <add>, %5, %cst [1] : vector<32x32xf32> to vector<32xf32>
    %7 = vector.shape_cast %6 : vector<32xf32> to vector<32x1xf32>
    %cst_7 = arith.constant 1.000000e-24 : f32
    %8 = vector.broadcast %cst_7 : f32 to vector<32x1xf32>
    %9 = arith.maximumf %7, %8 : vector<32x1xf32>
    %10 = math.rsqrt %9 : vector<32x1xf32>
    %11 = vector.broadcast %10 : vector<32x1xf32> to vector<32x32xf32>
    %12 = arith.mulf %4, %11 : vector<32x32xf32>
    %13 = vector.extract_strided_slice %0 {offsets = [0, 32], sizes = [32, 32], strides = [1, 1]} : vector<32x96xf32> to vector<32x32xf32>
    %14 = arith.mulf %13, %13 : vector<32x32xf32>
    %cst_8 = arith.constant dense<0.000000e+00> : vector<32xf32>
    %15 = vector.multi_reduction <add>, %14, %cst_8 [1] : vector<32x32xf32> to vector<32xf32>
    %16 = vector.shape_cast %15 : vector<32xf32> to vector<32x1xf32>
    %cst_9 = arith.constant 1.000000e-24 : f32
    %17 = vector.broadcast %cst_9 : f32 to vector<32x1xf32>
    %18 = arith.maximumf %16, %17 : vector<32x1xf32>
    %19 = math.rsqrt %18 : vector<32x1xf32>
    %20 = vector.broadcast %19 : vector<32x1xf32> to vector<32x32xf32>
    %21 = arith.mulf %13, %20 : vector<32x32xf32>
    %22 = vector.extract_strided_slice %0 {offsets = [0, 64], sizes = [32, 32], strides = [1, 1]} : vector<32x96xf32> to vector<32x32xf32>
    %23 = arith.mulf %22, %22 : vector<32x32xf32>
    %cst_10 = arith.constant dense<0.000000e+00> : vector<32xf32>
    %24 = vector.multi_reduction <add>, %23, %cst_10 [1] : vector<32x32xf32> to vector<32xf32>
    %25 = vector.shape_cast %24 : vector<32xf32> to vector<32x1xf32>
    %cst_11 = arith.constant 1.000000e-24 : f32
    %26 = vector.broadcast %cst_11 : f32 to vector<32x1xf32>
    %27 = arith.maximumf %25, %26 : vector<32x1xf32>
    %28 = math.rsqrt %27 : vector<32x1xf32>
    %29 = vector.broadcast %28 : vector<32x1xf32> to vector<32x32xf32>
    %30 = arith.mulf %22, %29 : vector<32x32xf32>
    %31 = tpu.concatenate %12, %21, %30 in 1 : vector<32x32xf32>, vector<32x32xf32>, vector<32x32xf32> -> vector<32x96xf32>
    %32 = arith.truncf %31 : vector<32x96xf32> to vector<32x96xbf16>
    %cst_12 = arith.constant dense<0.000000e+00> : vector<32x192xf32>
    %33 = tpu.matmul %32, %2, %cst_12 {dimension_numbers = #tpu.dot_dimension_numbers<[1], [1], [0], [0], [0, 0, 1, 0], [], []>} : vector<32x96xbf16>, vector<192x96xbf16>, vector<32x192xf32> -> vector<32x192xf32>
    %34 = vector.extract_strided_slice %33 {offsets = [0, 0], sizes = [32, 64], strides = [1, 1]} : vector<32x192xf32> to vector<32x64xf32>
    %35 = tpu.iota {dimensions = array<i32: 1>} : vector<32x64xi32>
    %cst_13 = arith.constant dense<0xFF800000> : vector<32xf32>
    %36 = vector.multi_reduction <maximumf>, %34, %cst_13 [1] : vector<32x64xf32> to vector<32xf32>
    %37 = vector.shape_cast %36 : vector<32xf32> to vector<32x1xf32>
    %38 = vector.broadcast %37 : vector<32x1xf32> to vector<32x64xf32>
    %39 = arith.cmpf oge, %34, %38 : vector<32x64xf32>
    %c64_i32 = arith.constant 64 : i32
    %40 = vector.broadcast %c64_i32 : i32 to vector<32x64xi32>
    %41 = arith.select %39, %35, %40 : vector<32x64xi1>, vector<32x64xi32>
    %cst_14 = arith.constant dense<2147483647> : vector<32xi32>
    %42 = vector.multi_reduction <minsi>, %41, %cst_14 [1] : vector<32x64xi32> to vector<32xi32>
    %43 = vector.shape_cast %42 : vector<32xi32> to vector<32x1xi32>
    %44 = vector.broadcast %43 : vector<32x1xi32> to vector<32x64xi32>
    %45 = arith.cmpi eq, %35, %44 : vector<32x64xi32>
    %46 = arith.extui %45 : vector<32x64xi1> to vector<32x64xi32>
    %47 = arith.sitofp %46 : vector<32x64xi32> to vector<32x64xf32>
    %48 = vector.extract_strided_slice %33 {offsets = [0, 64], sizes = [32, 64], strides = [1, 1]} : vector<32x192xf32> to vector<32x64xf32>
    %49 = tpu.iota {dimensions = array<i32: 1>} : vector<32x64xi32>
    %cst_15 = arith.constant dense<0xFF800000> : vector<32xf32>
    %50 = vector.multi_reduction <maximumf>, %48, %cst_15 [1] : vector<32x64xf32> to vector<32xf32>
    %51 = vector.shape_cast %50 : vector<32xf32> to vector<32x1xf32>
    %52 = vector.broadcast %51 : vector<32x1xf32> to vector<32x64xf32>
    %53 = arith.cmpf oge, %48, %52 : vector<32x64xf32>
    %c64_i32_16 = arith.constant 64 : i32
    %54 = vector.broadcast %c64_i32_16 : i32 to vector<32x64xi32>
    %55 = arith.select %53, %49, %54 : vector<32x64xi1>, vector<32x64xi32>
    %cst_17 = arith.constant dense<2147483647> : vector<32xi32>
    %56 = vector.multi_reduction <minsi>, %55, %cst_17 [1] : vector<32x64xi32> to vector<32xi32>
    %57 = vector.shape_cast %56 : vector<32xi32> to vector<32x1xi32>
    %58 = vector.broadcast %57 : vector<32x1xi32> to vector<32x64xi32>
    %59 = arith.cmpi eq, %49, %58 : vector<32x64xi32>
    %60 = arith.extui %59 : vector<32x64xi1> to vector<32x64xi32>
    %61 = arith.sitofp %60 : vector<32x64xi32> to vector<32x64xf32>
    %62 = vector.extract_strided_slice %33 {offsets = [0, 128], sizes = [32, 64], strides = [1, 1]} : vector<32x192xf32> to vector<32x64xf32>
    %63 = tpu.iota {dimensions = array<i32: 1>} : vector<32x64xi32>
    %cst_18 = arith.constant dense<0xFF800000> : vector<32xf32>
    %64 = vector.multi_reduction <maximumf>, %62, %cst_18 [1] : vector<32x64xf32> to vector<32xf32>
    %65 = vector.shape_cast %64 : vector<32xf32> to vector<32x1xf32>
    %66 = vector.broadcast %65 : vector<32x1xf32> to vector<32x64xf32>
    %67 = arith.cmpf oge, %62, %66 : vector<32x64xf32>
    %c64_i32_19 = arith.constant 64 : i32
    %68 = vector.broadcast %c64_i32_19 : i32 to vector<32x64xi32>
    %69 = arith.select %67, %63, %68 : vector<32x64xi1>, vector<32x64xi32>
    %cst_20 = arith.constant dense<2147483647> : vector<32xi32>
    %70 = vector.multi_reduction <minsi>, %69, %cst_20 [1] : vector<32x64xi32> to vector<32xi32>
    %71 = vector.shape_cast %70 : vector<32xi32> to vector<32x1xi32>
    %72 = vector.broadcast %71 : vector<32x1xi32> to vector<32x64xi32>
    %73 = arith.cmpi eq, %63, %72 : vector<32x64xi32>
    %74 = arith.extui %73 : vector<32x64xi1> to vector<32x64xi32>
    %75 = arith.sitofp %74 : vector<32x64xi32> to vector<32x64xf32>
    %76 = tpu.concatenate %47, %61, %75 in 1 : vector<32x64xf32>, vector<32x64xf32>, vector<32x64xf32> -> vector<32x192xf32>
    %cst_21 = arith.constant dense<0.000000e+00> : vector<32x96xf32>
    %77 = tpu.matmul %76, %3, %cst_21 {dimension_numbers = #tpu.dot_dimension_numbers<[1], [0], [0], [1], [0, 0, 1, 1], [], []>} : vector<32x192xf32>, vector<192x96xf32>, vector<32x96xf32> -> vector<32x96xf32>
    %c0_22 = arith.constant 0 : index
    %c0_23 = arith.constant 0 : index
    %78 = vector.load %arg5[%c0_22, %c0_23] : memref<32x96xf32, #tpu.memory_space<vmem>>, vector<32x96xf32>
    tpu.vector_store %arg5[%c0_22, %c0_23], %77 {strides = array<i32>} : memref<32x96xf32, #tpu.memory_space<vmem>>, vector<32x96xf32>,
    %79 = arith.subf %77, %31 : vector<32x96xf32>
    %80 = arith.mulf %79, %79 : vector<32x96xf32>
    %81 = vector.broadcast %1 : vector<32x1xf32> to vector<32x96xf32>
    %82 = arith.mulf %80, %81 : vector<32x96xf32>
    %83 = vector.shape_cast %82 : vector<32x96xf32> to vector<1x32x96xf32>
    %cst_24 = arith.constant dense<0.000000e+00> : vector<1xf32>
    %84 = vector.multi_reduction <add>, %83, %cst_24 [1, 2] : vector<1x32x96xf32> to vector<1xf32>
    %85 = vector.shape_cast %84 : vector<1xf32> to vector<1x1x1xf32>
    %86 = vector.extract %85[0, 0, 0] : f32 from vector<1x1x1xf32>
    %87 = vector.shape_cast %1 : vector<32x1xf32> to vector<1x32x1xf32>
    %cst_25 = arith.constant dense<0.000000e+00> : vector<1xf32>
    %88 = vector.multi_reduction <add>, %87, %cst_25 [1, 2] : vector<1x32x1xf32> to vector<1xf32>
    %89 = vector.shape_cast %88 : vector<1xf32> to vector<1x1x1xf32>
    %90 = vector.extract %89[0, 0, 0] : f32 from vector<1x1x1xf32>
    %91 = tpu.iota {dimensions = array<i32: 0>} : vector<8x128xi32>
    %92 = tpu.iota {dimensions = array<i32: 1>} : vector<8x128xi32>
    %c0_i32 = arith.constant 0 : i32
    %93 = vector.broadcast %c0_i32 : i32 to vector<8x128xi32>
    %94 = arith.cmpi eq, %91, %93 : vector<8x128xi32>
    %c0_i32_26 = arith.constant 0 : i32
    %95 = vector.broadcast %c0_i32_26 : i32 to vector<8x128xi32>
    %96 = arith.cmpi eq, %92, %95 : vector<8x128xi32>
    %97 = arith.andi %94, %96 : vector<8x128xi1>
    %c0_i32_27 = arith.constant 0 : i32
    %98 = vector.broadcast %c0_i32_27 : i32 to vector<8x128xi32>
    %99 = arith.cmpi eq, %91, %98 : vector<8x128xi32>
    %c1_i32 = arith.constant 1 : i32
    %100 = vector.broadcast %c1_i32 : i32 to vector<8x128xi32>
    %101 = arith.cmpi eq, %92, %100 : vector<8x128xi32>
    %102 = arith.andi %99, %101 : vector<8x128xi1>
    %cst_28 = arith.constant 0.000000e+00 : f32
    %103 = vector.broadcast %90 : f32 to vector<8x128xf32>
    %104 = vector.broadcast %cst_28 : f32 to vector<8x128xf32>
    %105 = arith.select %102, %103, %104 : vector<8x128xi1>, vector<8x128xf32>
    %106 = vector.broadcast %86 : f32 to vector<8x128xf32>
    %107 = arith.select %97, %106, %105 : vector<8x128xi1>, vector<8x128xf32>
    %c0_29 = arith.constant 0 : index
    %c0_30 = arith.constant 0 : index
    %108 = vector.load %arg6[%c0_29, %c0_30] : memref<8x128xf32, #tpu.memory_space<vmem>>, vector<8x128xf32>
    tpu.vector_store %arg6[%c0_29, %c0_30], %107 {strides = array<i32>} : memref<8x128xf32, #tpu.memory_space<vmem>>, vector<8x128xf32>,
    return
  }
  func.func @transform_0(%arg0: i32) -> (i32, i32) {
    %c0_i32 = arith.constant 0 : i32
    %c0_i32_0 = arith.constant 0 : i32
    return %arg0, %c0_i32 : i32, i32
  }
  func.func @transform_1(%arg0: i32) -> (i32, i32) {
    %c0_i32 = arith.constant 0 : i32
    %c0_i32_0 = arith.constant 0 : i32
    %c0_i32_1 = arith.constant 0 : i32
    return %c0_i32, %c0_i32_0 : i32, i32
  }
  func.func @transform_2(%arg0: i32) -> (i32, i32) {
    %c0_i32 = arith.constant 0 : i32
    %c0_i32_0 = arith.constant 0 : i32
    %c0_i32_1 = arith.constant 0 : i32
    return %c0_i32, %c0_i32_0 : i32, i32
  }
  func.func @transform_3(%arg0: i32) -> (i32, i32) {
    %c0_i32 = arith.constant 0 : i32
    %c0_i32_0 = arith.constant 0 : i32
    return %arg0, %c0_i32 : i32, i32
  }
  func.func @transform_4(%arg0: i32) -> (i32, i32) {
    %c0_i32 = arith.constant 0 : i32
    %c0_i32_0 = arith.constant 0 : i32
    return %arg0, %c0_i32 : i32, i32
  }
  func.func @transform_5(%arg0: i32) -> (i32, i32) {
    %c0_i32 = arith.constant 0 : i32
    %c0_i32_0 = arith.constant 0 : i32
    return %arg0, %c0_i32 : i32, i32
  }
}

</mosaic_0001>

<llo_original>
// kernel: codebook_vq_forward.1
$region0: #{codebook_vq_forward.1}
  #allocation0 [shape = 'u32[]', space=smem, size = 0x4, offset = 0x4, fixed_abs, tag = 'smem constant byte address 0x4 - core index']
  #allocation1 [shape = 'u32[144,128]{1,0:T(1,128)}', space=vmem, size = 0x12000, scoped, tag = 'internal scratch']
  %s0 = inlined_call_operand.vmem [shape: f32[32,96], index: 0, kind: input, shape index: {}]
  %s1 = inlined_call_operand.vmem [shape: bf16[192,96], index: 1, kind: input, shape index: {}]
  %s2 = inlined_call_operand.vmem [shape: f32[192,96], index: 2, kind: input, shape index: {}]
  %s3 = inlined_call_operand.vmem [shape: f32[32,1], index: 3, kind: input, shape index: {}]
  %s4 = inlined_call_operand.vmem [shape: f32[32,96], index: 4, kind: output, shape index: {0}]
  %s5 = inlined_call_operand.vmem [shape: f32[8,128], index: 5, kind: output, shape index: {1}]
  %6 = xla_tuple %s4, %s5
  %s7 = sld [smem:[#allocation0]]
  $region34: #{codebook_vq_forward.1} parent=0
    _
  %s9 = ssub.s32 1, %s7
  %s10 = scalar_select 0, %s9, %s7
  // Predicated region
  $region2: #{codebook_vq_forward.1} parent=0 // pred_check
    _
  $region3: #{codebook_vq_forward.1} parent=0 // pred_check_branch
    %12 = sbr.rel (0) target = $region5
  $region4: #{codebook_vq_forward.1} parent=0 // pred_region
    _
  $region5: #{codebook_vq_forward.1} parent=0 // pred_fallthru
    _
  // Predicated region
  $region6: #{codebook_vq_forward.1} parent=0 // pred_check
    _
  $region7: #{codebook_vq_forward.1} parent=0 // pred_check_branch
    %14 = sbr.rel (0) target = $region9
  $region8: #{codebook_vq_forward.1} parent=0 // pred_region
    _
  $region9: #{codebook_vq_forward.1} parent=0 // pred_fallthru
    _
  // Predicated region
  $region10: #{codebook_vq_forward.1} parent=0 // pred_check
    _
  $region11: #{codebook_vq_forward.1} parent=0 // pred_check_branch
    %16 = sbr.rel (0) target = $region13
  $region12: #{codebook_vq_forward.1} parent=0 // pred_region
    _
  $region13: #{codebook_vq_forward.1} parent=0 // pred_fallthru
    _
  // Predicated region
  $region14: #{codebook_vq_forward.1} parent=0 // pred_check
    _
  $region15: #{codebook_vq_forward.1} parent=0 // pred_check_branch
    %18 = sbr.rel (0) target = $region17
  $region16: #{codebook_vq_forward.1} parent=0 // pred_region
    _
  $region17: #{codebook_vq_forward.1} parent=0 // pred_fallthru
    _
  %v20 = vld [vmem:[%s0] sm:$0xff]
  %v21 = vld [vmem:[%s0 + $0x8] sm:$0xff]
  %v22 = vld [vmem:[%s0 + $0x10] sm:$0xff]
  %v23 = vld [vmem:[%s0 + $0x18] sm:$0xff]
  %v24 = vld [vmem:[%s3] sm:$0xff]
  %v25 = vld [vmem:[%s3 + $0x8] sm:$0xff]
  %v26 = vld [vmem:[%s3 + $0x10] sm:$0xff]
  %v27 = vld [vmem:[%s3 + $0x18] sm:$0xff]
  %v28 = vld [vmem:[%s1] sm:$0xf]
  %v29 = vld [vmem:[%s1 + $0x4] sm:$0xf]
  %v30 = vld [vmem:[%s1 + $0x8] sm:$0xf]
  %v31 = vld [vmem:[%s1 + $0xc] sm:$0xf]
  %v32 = vld [vmem:[%s1 + $0x10] sm:$0xf]
  %v33 = vld [vmem:[%s1 + $0x14] sm:$0xf]
  %v34 = vld [vmem:[%s1 + $0x18] sm:$0xf]
  %v35 = vld [vmem:[%s1 + $0x1c] sm:$0xf]
  %v36 = vld [vmem:[%s1 + $0x20] sm:$0xf]
  %v37 = vld [vmem:[%s1 + $0x24] sm:$0xf]
  %v38 = vld [vmem:[%s1 + $0x28] sm:$0xf]
  %v39 = vld [vmem:[%s1 + $0x2c] sm:$0xf]
  %v40 = vld [vmem:[%s1 + $0x30] sm:$0xf]
  %v41 = vld [vmem:[%s1 + $0x34] sm:$0xf]
  %v42 = vld [vmem:[%s1 + $0x38] sm:$0xf]
  %v43 = vld [vmem:[%s1 + $0x3c] sm:$0xf]
  %v44 = vld [vmem:[%s1 + $0x40] sm:$0xf]
  %v45 = vld [vmem:[%s1 + $0x44] sm:$0xf]
  %v46 = vld [vmem:[%s1 + $0x48] sm:$0xf]
  %v47 = vld [vmem:[%s1 + $0x4c] sm:$0xf]
  %v48 = vld [vmem:[%s1 + $0x50] sm:$0xf]
  %v49 = vld [vmem:[%s1 + $0x54] sm:$0xf]
  %v50 = vld [vmem:[%s1 + $0x58] sm:$0xf]
  %v51 = vld [vmem:[%s1 + $0x5c] sm:$0xf]
  %v52 = vld [vmem:[%s2] sm:$0xff]
  %v53 = vld [vmem:[%s2 + $0x8] sm:$0xff]
  %v54 = vld [vmem:[%s2 + $0x10] sm:$0xff]
  %v55 = vld [vmem:[%s2 + $0x18] sm:$0xff]
  %v56 = vld [vmem:[%s2 + $0x20] sm:$0xff]
  %v57 = vld [vmem:[%s2 + $0x28] sm:$0xff]
  %v58 = vld [vmem:[%s2 + $0x30] sm:$0xff]
  %v59 = vld [vmem:[%s2 + $0x38] sm:$0xff]
  %v60 = vld [vmem:[%s2 + $0x40] sm:$0xff]
  %v61 = vld [vmem:[%s2 + $0x48] sm:$0xff]
  %v62 = vld [vmem:[%s2 + $0x50] sm:$0xff]
  %v63 = vld [vmem:[%s2 + $0x58] sm:$0xff]
  %v64 = vld [vmem:[%s2 + $0x60] sm:$0xff]
  %v65 = vld [vmem:[%s2 + $0x68] sm:$0xff]
  %v66 = vld [vmem:[%s2 + $0x70] sm:$0xff]
  %v67 = vld [vmem:[%s2 + $0x78] sm:$0xff]
  %v68 = vld [vmem:[%s2 + $0x80] sm:$0xff]
  %v69 = vld [vmem:[%s2 + $0x88] sm:$0xff]
  %v70 = vld [vmem:[%s2 + $0x90] sm:$0xff]
  %v71 = vld [vmem:[%s2 + $0x98] sm:$0xff]
  %v72 = vld [vmem:[%s2 + $0xa0] sm:$0xff]
  %v73 = vld [vmem:[%s2 + $0xa8] sm:$0xff]
  %v74 = vld [vmem:[%s2 + $0xb0] sm:$0xff]
  %v75 = vld [vmem:[%s2 + $0xb8] sm:$0xff]
  %v76 = vmul.f32 %v20, %v20
  %v77 = vmul.f32 %v21, %v21
  %v78 = vmul.f32 %v22, %v22
  %v79 = vmul.f32 %v23, %v23
  %vm80 = vcmask 261120
  %v81 = vsel %vm80, %v76, 0.0
  %82 = vadd.xlane.f32.xlu0 %v81
  %v83 = vpop.xlane.xlu0 %82
  %v84 = vsel %vm80, %v77, 0.0
  %85 = vadd.xlane.f32.xlu0 %v84
  %v86 = vpop.xlane.xlu0 %85
  %v87 = vsel %vm80, %v78, 0.0
  %88 = vadd.xlane.f32.xlu0 %v87
  %v89 = vpop.xlane.xlu0 %88
  %v90 = vsel %vm80, %v79, 0.0
  %91 = vadd.xlane.f32.xlu0 %v90
  %v92 = vpop.xlane.xlu0 %91
  %v93 = vmax.f32 %v83, 1e-24
  %v94 = vmax.f32 %v86, 1e-24
  %v95 = vmax.f32 %v89, 1e-24
  %v96 = vmax.f32 %v92, 1e-24
  %v97 = vrsqrt.pop %v93
  %v98 = vrsqrt.pop %v94
  %v99 = vrsqrt.pop %v95
  %v100 = vrsqrt.pop %v96
  %v101 = vmul.f32 %v20, %v97
  %v102 = vmul.f32 %v21, %v98
  %v103 = vmul.f32 %v22, %v99
  %v104 = vmul.f32 %v23, %v100
  %109 = vrot.lane.b32.xlu0 %v76, 96
  %v110 = vpop.permute.xlu0 %109
  %111 = vrot.lane.b32.xlu0 %v77, 96
  %v112 = vpop.permute.xlu0 %111
  %113 = vrot.lane.b32.xlu0 %v78, 96
  %v114 = vpop.permute.xlu0 %113
  %115 = vrot.lane.b32.xlu0 %v79, 96
  %v116 = vpop.permute.xlu0 %115
  %v121 = vsel %vm80, %v110, 0.0
  %122 = vadd.xlane.f32.xlu0 %v121
  %v123 = vpop.xlane.xlu0 %122
  %v124 = vsel %vm80, %v112, 0.0
  %125 = vadd.xlane.f32.xlu0 %v124
  %v126 = vpop.xlane.xlu0 %125
  %v127 = vsel %vm80, %v114, 0.0
  %128 = vadd.xlane.f32.xlu0 %v127
  %v129 = vpop.xlane.xlu0 %128
  %v130 = vsel %vm80, %v116, 0.0
  %131 = vadd.xlane.f32.xlu0 %v130
  %v132 = vpop.xlane.xlu0 %131
  %v133 = vmax.f32 %v123, 1e-24
  %v134 = vmax.f32 %v126, 1e-24
  %v135 = vmax.f32 %v129, 1e-24
  %v136 = vmax.f32 %v132, 1e-24
  %v137 = vrsqrt.pop %v133
  %v138 = vrsqrt.pop %v134
  %v139 = vrsqrt.pop %v135
  %v140 = vrsqrt.pop %v136
  %v141 = vmul.f32 %v20, %v137
  %v142 = vmul.f32 %v21, %v138
  %v143 = vmul.f32 %v22, %v139
  %v144 = vmul.f32 %v23, %v140
  %145 = vrot.lane.b32.xlu0 %v76, 64
  %v146 = vpop.permute.xlu0 %145
  %147 = vrot.lane.b32.xlu0 %v77, 64
  %v148 = vpop.permute.xlu0 %147
  %149 = vrot.lane.b32.xlu0 %v78, 64
  %v150 = vpop.permute.xlu0 %149
  %151 = vrot.lane.b32.xlu0 %v79, 64
  %v152 = vpop.permute.xlu0 %151
  %v157 = vsel %vm80, %v146, 0.0
  %158 = vadd.xlane.f32.xlu0 %v157
  %v159 = vpop.xlane.xlu0 %158
  %v160 = vsel %vm80, %v148, 0.0
  %161 = vadd.xlane.f32.xlu0 %v160
  %v162 = vpop.xlane.xlu0 %161
  %v163 = vsel %vm80, %v150, 0.0
  %164 = vadd.xlane.f32.xlu0 %v163
  %v165 = vpop.xlane.xlu0 %164
  %v166 = vsel %vm80, %v152, 0.0
  %167 = vadd.xlane.f32.xlu0 %v166
  %v168 = vpop.xlane.xlu0 %167
  %v169 = vmax.f32 %v159, 1e-24
  %v170 = vmax.f32 %v162, 1e-24
  %v171 = vmax.f32 %v165, 1e-24
  %v172 = vmax.f32 %v168, 1e-24
  %v173 = vrsqrt.pop %v169
  %v174 = vrsqrt.pop %v170
  %v175 = vrsqrt.pop %v171
  %v176 = vrsqrt.pop %v172
  %v177 = vmul.f32 %v20, %v173
  %v178 = vmul.f32 %v21, %v174
  %v179 = vmul.f32 %v22, %v175
  %v180 = vmul.f32 %v23, %v176
  %v181 = vsel %vm80, %v101, %v141
  %v182 = vsel %vm80, %v102, %v142
  %v183 = vsel %vm80, %v103, %v143
  %v184 = vsel %vm80, %v104, %v144
  %vm185 = vcmask 523264
  %v186 = vsel %vm185, %v181, %v177
  %v187 = vsel %vm185, %v182, %v178
  %v188 = vsel %vm185, %v183, %v179
  %v189 = vsel %vm185, %v184, %v180
  %v190 = vpack.c.bf16 %v187, %v186
  %v191 = vpack.c.bf16 %v189, %v188
  %v216 = vunpack.c.l.b16 %v28
  %v217 = vunpack.c.l.b16 %v29
  %v218 = vunpack.c.l.b16 %v30
  %v219 = vunpack.c.l.b16 %v31
  %v220 = vunpack.c.l.b16 %v32
  %v221 = vunpack.c.l.b16 %v33
  %v222 = vunpack.c.l.b16 %v34
  %v223 = vunpack.c.l.b16 %v35
  %v224 = vunpack.c.l.b16 %v36
  %v225 = vunpack.c.l.b16 %v37
  %v226 = vunpack.c.l.b16 %v38
  %v227 = vunpack.c.l.b16 %v39
  %v228 = vunpack.c.l.b16 %v40
  %v229 = vunpack.c.l.b16 %v41
  %v230 = vunpack.c.l.b16 %v42
  %v231 = vunpack.c.l.b16 %v43
  %v232 = vunpack.c.l.b16 %v44
  %v233 = vunpack.c.l.b16 %v45
  %v234 = vunpack.c.l.b16 %v46
  %v235 = vunpack.c.l.b16 %v47
  %v236 = vunpack.c.l.b16 %v48
  %v237 = vunpack.c.l.b16 %v49
  %v238 = vunpack.c.l.b16 %v50
  %v239 = vunpack.c.l.b16 %v51
  %v240 = vpack.c.b16 %v217, %v216
  %v241 = vpack.c.b16 %v219, %v218
  %v242 = vpack.c.b16 %v221, %v220
  %v243 = vpack.c.b16 %v223, %v222
  %v244 = vpack.c.b16 %v225, %v224
  %v245 = vpack.c.b16 %v227, %v226
  %v246 = vpack.c.b16 %v229, %v228
  %v247 = vpack.c.b16 %v231, %v230
  %v248 = vpack.c.b16 %v233, %v232
  %v249 = vpack.c.b16 %v235, %v234
  %v250 = vpack.c.b16 %v237, %v236
  %v251 = vpack.c.b16 %v239, %v238
  %vm252 = vcmask 785408
  %v254 = vsel %vm252, %v190, 0
  %v257 = vsel %vm252, %v191, 0
  %v260 = vsel %vm252, %v240, 0
  %v263 = vsel %vm252, %v241, 0
  %v266 = vsel %vm252, %v242, 0
  %v269 = vsel %vm252, %v243, 0
  %v272 = vsel %vm252, %v244, 0
  %v275 = vsel %vm252, %v245, 0
  %v278 = vsel %vm252, %v246, 0
  %v281 = vsel %vm252, %v247, 0
  %v284 = vsel %vm252, %v248, 0
  %v287 = vsel %vm252, %v249, 0
  %v290 = vsel %vm252, %v250, 0
  %v293 = vsel %vm252, %v251, 0
  %295 = vmatprep.subr.bf16.mxu0 0
  %296 = vmatpush1.bf16.xpose.msra.mxu0 %v260
  %297 = vmatprep.subr.bf16.mxu0 0
  %298 = vmatpush1.bf16.xpose.msra.mxu0 %v263
  %299 = vmatprep.subr.bf16.mxu0 0
  %300 = vmatpush1.bf16.xpose.msra.mxu0 %v266
  %301 = vmatprep.subr.bf16.mxu0 0
  %302 = vmatpush1.bf16.xpose.msra.mxu0 %v269
  %303 = vmatprep.subr.bf16.mxu0 0
  %304 = vmatpush1.bf16.xpose.msra.mxu0 %v272
  %305 = vmatprep.subr.bf16.mxu0 0
  %306 = vmatpush1.bf16.xpose.msra.mxu0 %v275
  %307 = vmatprep.subr.bf16.mxu0 0
  %308 = vmatpush1.bf16.xpose.msra.mxu0 %v278
  %309 = vmatprep.subr.bf16.mxu0 0
  %310 = vmatpush1.bf16.xpose.msra.mxu0 %v281
  %311 = vmatprep.subr.bf16.mxu0 0
  %312 = vmatpush1.bf16.xpose.msra.mxu0 %v284
  %313 = vmatprep.subr.bf16.mxu0 0
  %314 = vmatpush1.bf16.xpose.msra.mxu0 %v287
  %315 = vmatprep.subr.bf16.mxu0 0
  %316 = vmatpush1.bf16.xpose.msra.mxu0 %v290
  %317 = vmatprep.subr.bf16.mxu0 0
  %318 = vmatpush1.bf16.xpose.msra.mxu0 %v293
  %319 = vmatprep.subr.bf16.mxu0 0
  %320 = vmatpush1.bf16.xpose.msra.mxu0 0
  %321 = vmatprep.subr.bf16.mxu0 0
  %322 = vmatpush1.bf16.xpose.msra.mxu0 0
  %323 = vmatprep.subr.bf16.mxu0 0
  %324 = vmatpush1.bf16.xpose.msra.mxu0 0
  %325 = vmatprep.subr.bf16.mxu0 0
  %326 = vmatpush1.bf16.xpose.msra.mxu0 0
  %327 = vmatprep.mubr.bf16.mxu0 0
  %328 = vmatmul.mubr.bf16.gmra.mrb[0].mxu0 %v254
  %v329 = vpop.f32.mrb[0].mxu0
  %v330 = vadd.f32 0.0, %v329
  %v331 = vpop.f32.mrb[0].mxu0
  %v332 = vadd.f32 0.0, %v331
  %v333 = vpop.f32.mrb[0].mxu0
  %v334 = vadd.f32 0.0, %v333
  %v335 = vpop.f32.mrb[0].mxu0
  %v336 = vadd.f32 0.0, %v335
  %337 = vmatprep.mubr.bf16.mxu0 0
  %338 = vmatmul.mubr.bf16.gmra.mrb[0].mxu0 %v257
  %v339 = vpop.f32.mrb[0].mxu0
  %v340 = vadd.f32 0.0, %v339
  %v341 = vpop.f32.mrb[0].mxu0
  %v342 = vadd.f32 0.0, %v341
  %v343 = vpop.f32.mrb[0].mxu0
  %v344 = vadd.f32 0.0, %v343
  %v345 = vpop.f32.mrb[0].mxu0
  %v346 = vadd.f32 0.0, %v345
  %347 = vdwg.mxu0
  %v348 = vlaneseq
  %v349 = vand.u32 %v348, 127
  %v350 = vsel %vm185, %v330, -inf
  %351 = vmax.xlane.f32.xlu0 %v350
  %v352 = vpop.xlane.xlu0 %351
  %v353 = vsel %vm185, %v334, -inf
  %354 = vmax.xlane.f32.xlu0 %v353
  %v355 = vpop.xlane.xlu0 %354
  %v356 = vsel %vm185, %v340, -inf
  %357 = vmax.xlane.f32.xlu0 %v356
  %v358 = vpop.xlane.xlu0 %357
  %v359 = vsel %vm185, %v344, -inf
  %360 = vmax.xlane.f32.xlu0 %v359
  %v361 = vpop.xlane.xlu0 %360
  %vm362 = vcmp.ge.f32.partialorder %v330, %v352
  %vm363 = vcmp.ge.f32.partialorder %v334, %v355
  %vm364 = vcmp.ge.f32.partialorder %v340, %v358
  %vm365 = vcmp.ge.f32.partialorder %v344, %v361
  %v366 = vsel %vm362, %v349, 64
  %v367 = vsel %vm363, %v349, 64
  %v368 = vsel %vm364, %v349, 64
  %v369 = vsel %vm365, %v349, 64
  %v370 = vsel %vm185, %v366, 2147483647
  %v371 = vand.u32 %v370, 65535
  %v372 = vshra.s32 %v370, 16
  %v373 = vcvt.s32.f32 %v371
  %v374 = vcvt.s32.f32 %v372
  %375 = vmin.xlane.f32.xlu0 %v374
  %v376 = vpop.xlane.xlu0 %375
  %vm377 = vcmp.eq.f32.partialorder %v374, %v376
  %v378 = vsel %vm377, %v373, inf
  %379 = vmin.xlane.f32.xlu0 %v378
  %v380 = vpop.xlane.xlu0 %379
  %v381 = vcvt.f32.s32 %v380
  %v382 = vcvt.f32.s32 %v376
  %v383 = vshll.u32 %v382, 16
  %v384 = vadd.s32 %v383, %v381
  %v385 = vsel %vm185, %v367, 2147483647
  %v386 = vand.u32 %v385, 65535
  %v387 = vshra.s32 %v385, 16
  %v388 = vcvt.s32.f32 %v386
  %v389 = vcvt.s32.f32 %v387
  %390 = vmin.xlane.f32.xlu0 %v389
  %v391 = vpop.xlane.xlu0 %390
  %vm392 = vcmp.eq.f32.partialorder %v389, %v391
  %v393 = vsel %vm392, %v388, inf
  %394 = vmin.xlane.f32.xlu0 %v393
  %v395 = vpop.xlane.xlu0 %394
  %v396 = vcvt.f32.s32 %v395
  %v397 = vcvt.f32.s32 %v391
  %v398 = vshll.u32 %v397, 16
  %v399 = vadd.s32 %v398, %v396
  %v400 = vsel %vm185, %v368, 2147483647
  %v401 = vand.u32 %v400, 65535
  %v402 = vshra.s32 %v400, 16
  %v403 = vcvt.s32.f32 %v401
  %v404 = vcvt.s32.f32 %v402
  %405 = vmin.xlane.f32.xlu0 %v404
  %v406 = vpop.xlane.xlu0 %405
  %vm407 = vcmp.eq.f32.partialorder %v404, %v406
  %v408 = vsel %vm407, %v403, inf
  %409 = vmin.xlane.f32.xlu0 %v408
  %v410 = vpop.xlane.xlu0 %409
  %v411 = vcvt.f32.s32 %v410
  %v412 = vcvt.f32.s32 %v406
  %v413 = vshll.u32 %v412, 16
  %v414 = vadd.s32 %v413, %v411
  %v415 = vsel %vm185, %v369, 2147483647
  %v416 = vand.u32 %v415, 65535
  %v417 = vshra.s32 %v415, 16
  %v418 = vcvt.s32.f32 %v416
  %v419 = vcvt.s32.f32 %v417
  %420 = vmin.xlane.f32.xlu0 %v419
  %v421 = vpop.xlane.xlu0 %420
  %vm422 = vcmp.eq.f32.partialorder %v419, %v421
  %v423 = vsel %vm422, %v418, inf
  %424 = vmin.xlane.f32.xlu0 %v423
  %v425 = vpop.xlane.xlu0 %424
  %v426 = vcvt.f32.s32 %v425
  %v427 = vcvt.f32.s32 %v421
  %v428 = vshll.u32 %v427, 16
  %v429 = vadd.s32 %v428, %v426
  %vm430 = vcmp.eq.s32.totalorder %v349, %v384
  %vm431 = vcmp.eq.s32.totalorder %v349, %v399
  %vm432 = vcmp.eq.s32.totalorder %v349, %v414
  %vm433 = vcmp.eq.s32.totalorder %v349, %v429
  %v434 = vsel %vm430, 1, 0
  %v435 = vsel %vm431, 1, 0
  %v436 = vsel %vm432, 1, 0
  %v437 = vsel %vm433, 1, 0
  %v438 = vcvt.s32.f32 %v434
  %v439 = vcvt.s32.f32 %v435
  %v440 = vcvt.s32.f32 %v436
  %v441 = vcvt.s32.f32 %v437
  %vm442 = vcmask 1048064
  %v443 = vsel %vm442, %v330, -inf
  %444 = vmax.xlane.f32.xlu0 %v443
  %v445 = vpop.xlane.xlu0 %444
  %v446 = vsel %vm442, %v334, -inf
  %447 = vmax.xlane.f32.xlu0 %v446
  %v448 = vpop.xlane.xlu0 %447
  %v449 = vsel %vm442, %v340, -inf
  %450 = vmax.xlane.f32.xlu0 %v449
  %v451 = vpop.xlane.xlu0 %450
  %v452 = vsel %vm442, %v344, -inf
  %453 = vmax.xlane.f32.xlu0 %v452
  %v454 = vpop.xlane.xlu0 %453
  %vm455 = vcmp.ge.f32.partialorder %v330, %v445
  %vm456 = vcmp.ge.f32.partialorder %v334, %v448
  %vm457 = vcmp.ge.f32.partialorder %v340, %v451
  %vm458 = vcmp.ge.f32.partialorder %v344, %v454
  %459 = vrot.lane.b32.xlu0 %v349, 64
  %v460 = vpop.permute.xlu0 %459
  %v461 = vsel %vm455, %v460, 64
  %v462 = vsel %vm456, %v460, 64
  %v463 = vsel %vm457, %v460, 64
  %v464 = vsel %vm458, %v460, 64
  %v465 = vsel %vm442, %v461, 2147483647
  %v466 = vand.u32 %v465, 65535
  %v467 = vshra.s32 %v465, 16
  %v468 = vcvt.s32.f32 %v466
  %v469 = vcvt.s32.f32 %v467
  %470 = vmin.xlane.f32.xlu0 %v469
  %v471 = vpop.xlane.xlu0 %470
  %vm472 = vcmp.eq.f32.partialorder %v469, %v471
  %v473 = vsel %vm472, %v468, inf
  %474 = vmin.xlane.f32.xlu0 %v473
  %v475 = vpop.xlane.xlu0 %474
  %v476 = vcvt.f32.s32 %v475
  %v477 = vcvt.f32.s32 %v471
  %v478 = vshll.u32 %v477, 16
  %v479 = vadd.s32 %v478, %v476
  %v480 = vsel %vm442, %v462, 2147483647
  %v481 = vand.u32 %v480, 65535
  %v482 = vshra.s32 %v480, 16
  %v483 = vcvt.s32.f32 %v481
  %v484 = vcvt.s32.f32 %v482
  %485 = vmin.xlane.f32.xlu0 %v484
  %v486 = vpop.xlane.xlu0 %485
  %vm487 = vcmp.eq.f32.partialorder %v484, %v486
  %v488 = vsel %vm487, %v483, inf
  %489 = vmin.xlane.f32.xlu0 %v488
  %v490 = vpop.xlane.xlu0 %489
  %v491 = vcvt.f32.s32 %v490
  %v492 = vcvt.f32.s32 %v486
  %v493 = vshll.u32 %v492, 16
  %v494 = vadd.s32 %v493, %v491
  %v495 = vsel %vm442, %v463, 2147483647
  %v496 = vand.u32 %v495, 65535
  %v497 = vshra.s32 %v495, 16
  %v498 = vcvt.s32.f32 %v496
  %v499 = vcvt.s32.f32 %v497
  %500 = vmin.xlane.f32.xlu0 %v499
  %v501 = vpop.xlane.xlu0 %500
  %vm502 = vcmp.eq.f32.partialorder %v499, %v501
  %v503 = vsel %vm502, %v498, inf
  %504 = vmin.xlane.f32.xlu0 %v503
  %v505 = vpop.xlane.xlu0 %504
  %v506 = vcvt.f32.s32 %v505
  %v507 = vcvt.f32.s32 %v501
  %v508 = vshll.u32 %v507, 16
  %v509 = vadd.s32 %v508, %v506
  %v510 = vsel %vm442, %v464, 2147483647
  %v511 = vand.u32 %v510, 65535
  %v512 = vshra.s32 %v510, 16
  %v513 = vcvt.s32.f32 %v511
  %v514 = vcvt.s32.f32 %v512
  %515 = vmin.xlane.f32.xlu0 %v514
  %v516 = vpop.xlane.xlu0 %515
  %vm517 = vcmp.eq.f32.partialorder %v514, %v516
  %v518 = vsel %vm517, %v513, inf
  %519 = vmin.xlane.f32.xlu0 %v518
  %v520 = vpop.xlane.xlu0 %519
  %v521 = vcvt.f32.s32 %v520
  %v522 = vcvt.f32.s32 %v516
  %v523 = vshll.u32 %v522, 16
  %v524 = vadd.s32 %v523, %v521
  %vm525 = vcmp.eq.s32.totalorder %v349, %v479
  %vm526 = vcmp.eq.s32.totalorder %v349, %v494
  %vm527 = vcmp.eq.s32.totalorder %v349, %v509
  %vm528 = vcmp.eq.s32.totalorder %v349, %v524
  %v529 = vsel %vm525, 1, 0
  %v530 = vsel %vm526, 1, 0
  %v531 = vsel %vm527, 1, 0
  %v532 = vsel %vm528, 1, 0
  %v533 = vcvt.s32.f32 %v529
  %v534 = vcvt.s32.f32 %v530
  %v535 = vcvt.s32.f32 %v531
  %v536 = vcvt.s32.f32 %v532
  %v537 = vsel %vm185, %v332, -inf
  %538 = vmax.xlane.f32.xlu0 %v537
  %v539 = vpop.xlane.xlu0 %538
  %v540 = vsel %vm185, %v336, -inf
  %541 = vmax.xlane.f32.xlu0 %v540
  %v542 = vpop.xlane.xlu0 %541
  %v543 = vsel %vm185, %v342, -inf
  %544 = vmax.xlane.f32.xlu0 %v543
  %v545 = vpop.xlane.xlu0 %544
  %v546 = vsel %vm185, %v346, -inf
  %547 = vmax.xlane.f32.xlu0 %v546
  %v548 = vpop.xlane.xlu0 %547
  %vm549 = vcmp.ge.f32.partialorder %v332, %v539
  %vm550 = vcmp.ge.f32.partialorder %v336, %v542
  %vm551 = vcmp.ge.f32.partialorder %v342, %v545
  %vm552 = vcmp.ge.f32.partialorder %v346, %v548
  %v553 = vsel %vm549, %v349, 64
  %v554 = vsel %vm550, %v349, 64
  %v555 = vsel %vm551, %v349, 64
  %v556 = vsel %vm552, %v349, 64
  %v557 = vsel %vm185, %v553, 2147483647
  %v558 = vand.u32 %v557, 65535
  %v559 = vshra.s32 %v557, 16
  %v560 = vcvt.s32.f32 %v558
  %v561 = vcvt.s32.f32 %v559
  %562 = vmin.xlane.f32.xlu0 %v561
  %v563 = vpop.xlane.xlu0 %562
  %vm564 = vcmp.eq.f32.partialorder %v561, %v563
  %v565 = vsel %vm564, %v560, inf
  %566 = vmin.xlane.f32.xlu0 %v565
  %v567 = vpop.xlane.xlu0 %566
  %v568 = vcvt.f32.s32 %v567
  %v569 = vcvt.f32.s32 %v563
  %v570 = vshll.u32 %v569, 16
  %v571 = vadd.s32 %v570, %v568
  %v572 = vsel %vm185, %v554, 2147483647
  %v573 = vand.u32 %v572, 65535
  %v574 = vshra.s32 %v572, 16
  %v575 = vcvt.s32.f32 %v573
  %v576 = vcvt.s32.f32 %v574
  %577 = vmin.xlane.f32.xlu0 %v576
  %v578 = vpop.xlane.xlu0 %577
  %vm579 = vcmp.eq.f32.partialorder %v576, %v578
  %v580 = vsel %vm579, %v575, inf
  %581 = vmin.xlane.f32.xlu0 %v580
  %v582 = vpop.xlane.xlu0 %581
  %v583 = vcvt.f32.s32 %v582
  %v584 = vcvt.f32.s32 %v578
  %v585 = vshll.u32 %v584, 16
  %v586 = vadd.s32 %v585, %v583
  %v587 = vsel %vm185, %v555, 2147483647
  %v588 = vand.u32 %v587, 65535
  %v589 = vshra.s32 %v587, 16
  %v590 = vcvt.s32.f32 %v588
  %v591 = vcvt.s32.f32 %v589
  %592 = vmin.xlane.f32.xlu0 %v591
  %v593 = vpop.xlane.xlu0 %592
  %vm594 = vcmp.eq.f32.partialorder %v591, %v593
  %v595 = vsel %vm594, %v590, inf
  %596 = vmin.xlane.f32.xlu0 %v595
  %v597 = vpop.xlane.xlu0 %596
  %v598 = vcvt.f32.s32 %v597
  %v599 = vcvt.f32.s32 %v593
  %v600 = vshll.u32 %v599, 16
  %v601 = vadd.s32 %v600, %v598
  %v602 = vsel %vm185, %v556, 2147483647
  %v603 = vand.u32 %v602, 65535
  %v604 = vshra.s32 %v602, 16
  %v605 = vcvt.s32.f32 %v603
  %v606 = vcvt.s32.f32 %v604
  %607 = vmin.xlane.f32.xlu0 %v606
  %v608 = vpop.xlane.xlu0 %607
  %vm609 = vcmp.eq.f32.partialorder %v606, %v608
  %v610 = vsel %vm609, %v605, inf
  %611 = vmin.xlane.f32.xlu0 %v610
  %v612 = vpop.xlane.xlu0 %611
  %v613 = vcvt.f32.s32 %v612
  %v614 = vcvt.f32.s32 %v608
  %v615 = vshll.u32 %v614, 16
  %v616 = vadd.s32 %v615, %v613
  %vm617 = vcmp.eq.s32.totalorder %v349, %v571
  %vm618 = vcmp.eq.s32.totalorder %v349, %v586
  %vm619 = vcmp.eq.s32.totalorder %v349, %v601
  %vm620 = vcmp.eq.s32.totalorder %v349, %v616
  %v621 = vsel %vm617, 1, 0
  %v622 = vsel %vm618, 1, 0
  %v623 = vsel %vm619, 1, 0
  %v624 = vsel %vm620, 1, 0
  %v625 = vcvt.s32.f32 %v621
  %v626 = vcvt.s32.f32 %v622
  %v627 = vcvt.s32.f32 %v623
  %v628 = vcvt.s32.f32 %v624
  %633 = vrot.lane.b32.xlu0 %v533, 64
  %v634 = vpop.permute.xlu0 %633
  %635 = vrot.lane.b32.xlu0 %v534, 64
  %v636 = vpop.permute.xlu0 %635
  %637 = vrot.lane.b32.xlu0 %v535, 64
  %v638 = vpop.permute.xlu0 %637
  %639 = vrot.lane.b32.xlu0 %v536, 64
  %v640 = vpop.permute.xlu0 %639
  %v645 = vsel %vm185, %v438, %v634
  %v646 = vsel %vm185, %v439, %v636
  %v647 = vsel %vm185, %v440, %v638
  %v648 = vsel %vm185, %v441, %v640
  %v650 = vsel %vm185, %v625, 0
  %v653 = vsel %vm185, %v626, 0
  %v656 = vsel %vm185, %v627, 0
  %v659 = vsel %vm185, %v628, 0
  %661 = vmatprep.subr.mxu0 0.0
  %662 = vmatpush1.msra.mxu0 %v52
  %663 = vmatprep.subr.mxu0 0.0
  %664 = vmatpush1.msra.mxu0 %v53
  %665 = vmatprep.subr.mxu0 0.0
  %666 = vmatpush1.msra.mxu0 %v54
  %667 = vmatprep.subr.mxu0 0.0
  %668 = vmatpush1.msra.mxu0 %v55
  %669 = vmatprep.subr.mxu0 0.0
  %670 = vmatpush1.msra.mxu0 %v56
  %671 = vmatprep.subr.mxu0 0.0
  %672 = vmatpush1.msra.mxu0 %v57
  %673 = vmatprep.subr.mxu0 0.0
  %674 = vmatpush1.msra.mxu0 %v58
  %675 = vmatprep.subr.mxu0 0.0
  %676 = vmatpush1.msra.mxu0 %v59
  %677 = vmatprep.subr.mxu0 0.0
  %678 = vmatpush1.msra.mxu0 %v60
  %679 = vmatprep.subr.mxu0 0.0
  %680 = vmatpush1.msra.mxu0 %v61
  %681 = vmatprep.subr.mxu0 0.0
  %682 = vmatpush1.msra.mxu0 %v62
  %683 = vmatprep.subr.mxu0 0.0
  %684 = vmatpush1.msra.mxu0 %v63
  %685 = vmatprep.subr.mxu0 0.0
  %686 = vmatpush1.msra.mxu0 %v64
  %687 = vmatprep.subr.mxu0 0.0
  %688 = vmatpush1.msra.mxu0 %v65
  %689 = vmatprep.subr.mxu0 0.0
  %690 = vmatpush1.msra.mxu0 %v66
  %691 = vmatprep.subr.mxu0 0.0
  %692 = vmatpush1.msra.mxu0 %v67
  %693 = vmatprep.subr.mxu0 0.0
  %694 = vmatpush1.msra.mxu0 %v68
  %695 = vmatprep.subr.mxu0 0.0
  %696 = vmatpush1.msra.mxu0 %v69
  %697 = vmatprep.subr.mxu0 0.0
  %698 = vmatpush1.msra.mxu0 %v70
  %699 = vmatprep.subr.mxu0 0.0
  %700 = vmatpush1.msra.mxu0 %v71
  %701 = vmatprep.subr.mxu0 0.0
  %702 = vmatpush1.msra.mxu0 %v72
  %703 = vmatprep.subr.mxu0 0.0
  %704 = vmatpush1.msra.mxu0 %v73
  %705 = vmatprep.subr.mxu0 0.0
  %706 = vmatpush1.msra.mxu0 %v74
  %707 = vmatprep.subr.mxu0 0.0
  %708 = vmatpush1.msra.mxu0 %v75
  %709 = vmatprep.subr.mxu0 0.0
  %710 = vmatpush1.msra.mxu0 0.0
  %711 = vmatprep.subr.mxu0 0.0
  %712 = vmatpush1.msra.mxu0 0.0
  %713 = vmatprep.subr.mxu0 0.0
  %714 = vmatpush1.msra.mxu0 0.0
  %715 = vmatprep.subr.mxu0 0.0
  %716 = vmatpush1.msra.mxu0 0.0
  %717 = vmatprep.subr.mxu0 0.0
  %718 = vmatpush1.msra.mxu0 0.0
  %719 = vmatprep.subr.mxu0 0.0
  %720 = vmatpush1.msra.mxu0 0.0
  %721 = vmatprep.subr.mxu0 0.0
  %722 = vmatpush1.msra.mxu0 0.0
  %723 = vmatprep.subr.mxu0 0.0
  %724 = vmatpush1.msra.mxu0 0.0
  %725 = vmatprep.mubr.f32.mxu0 %v650
  %726 = vmatmul.mubr.f32.gmra.mrb[0].mxu0 %v645
  %v727 = vpop.f32.mrb[0].mxu0
  %v728 = vadd.f32 0.0, %v727
  %v729 = vpop.f32.mrb[0].mxu0
  %730 = vmatprep.mubr.f32.mxu0 %v653
  %731 = vmatmul.mubr.f32.gmra.mrb[0].mxu0 %v646
  %v732 = vpop.f32.mrb[0].mxu0
  %v733 = vadd.f32 0.0, %v732
  %v734 = vpop.f32.mrb[0].mxu0
  %735 = vmatprep.mubr.f32.mxu0 %v656
  %736 = vmatmul.mubr.f32.gmra.mrb[0].mxu0 %v647
  %v737 = vpop.f32.mrb[0].mxu0
  %v738 = vadd.f32 0.0, %v737
  %v739 = vpop.f32.mrb[0].mxu0
  %740 = vmatprep.mubr.f32.mxu0 %v659
  %741 = vmatmul.mubr.f32.gmra.mrb[0].mxu0 %v648
  %v742 = vpop.f32.mrb[0].mxu0
  %v743 = vadd.f32 0.0, %v742
  %v744 = vpop.f32.mrb[0].mxu0
  %745 = vdwg.mxu0
  %746 = vst.msk [vmem:[%s4] sm:$0xff] %vm252, %v728
  %747 = vst.msk [vmem:[%s4 + $0x8] sm:$0xff] %vm252, %v733
  %748 = vst.msk [vmem:[%s4 + $0x10] sm:$0xff] %vm252, %v738
  %749 = vst.msk [vmem:[%s4 + $0x18] sm:$0xff] %vm252, %v743
  %v750 = vsub.f32 %v728, %v186
  %v751 = vsub.f32 %v733, %v187
  %v752 = vsub.f32 %v738, %v188
  %v753 = vsub.f32 %v743, %v189
  %v754 = vmul.f32 %v750, %v750
  %v755 = vmul.f32 %v751, %v751
  %v756 = vmul.f32 %v752, %v752
  %v757 = vmul.f32 %v753, %v753
  %759 = vset.pattern.permute.xlu0 0
  %760 = vperm.xlu0 %759, %v24
  %v761 = vpop.permute.xlu0 %760
  %764 = vset.pattern.permute.xlu0 0
  %765 = vperm.xlu0 %764, %v25
  %v766 = vpop.permute.xlu0 %765
  %769 = vset.pattern.permute.xlu0 0
  %770 = vperm.xlu0 %769, %v26
  %v771 = vpop.permute.xlu0 %770
  %774 = vset.pattern.permute.xlu0 0
  %775 = vperm.xlu0 %774, %v27
  %v776 = vpop.permute.xlu0 %775
  %v778 = vmul.f32 %v754, %v761
  %v779 = vmul.f32 %v755, %v766
  %v780 = vmul.f32 %v756, %v771
  %v781 = vmul.f32 %v757, %v776
  %v782 = vsel %vm252, %v778, 0.0
  %v783 = vsel %vm252, %v779, 0.0
  %v784 = vadd.f32 %v782, %v783
  %v785 = vsel %vm252, %v780, 0.0
  %v786 = vadd.f32 %v784, %v785
  %v787 = vsel %vm252, %v781, 0.0
  %v788 = vadd.f32 %v786, %v787
  %789 = vadd.xlane.f32.xlu0 %v788
  %v790 = vpop.xlane.xlu0 %789
  %v791 = vrot.slane %v790, 4
  %v792 = vadd.f32 %v790, %v791
  %v793 = vrot.slane %v792, 2
  %v794 = vadd.f32 %v792, %v793
  %v795 = vrot.slane %v794, 1
  %v796 = vadd.f32 %v794, %v795
  %s797 = vtos %v796
  %vm798 = vcmask 7168
  %v799 = vsel %vm798, %v24, 0.0
  %v800 = vsel %vm798, %v25, 0.0
  %v801 = vadd.f32 %v799, %v800
  %v802 = vsel %vm798, %v26, 0.0
  %v803 = vadd.f32 %v801, %v802
  %v804 = vsel %vm798, %v27, 0.0
  %v805 = vadd.f32 %v803, %v804
  %806 = vadd.xlane.f32.xlu0 %v805
  %v807 = vpop.xlane.xlu0 %806
  %v808 = vrot.slane %v807, 4
  %v809 = vadd.f32 %v807, %v808
  %v810 = vrot.slane %v809, 2
  %v811 = vadd.f32 %v809, %v810
  %v812 = vrot.slane %v811, 1
  %v813 = vadd.f32 %v811, %v812
  %s814 = vtos %v813
  %v815 = vlaneseq
  %v816 = vshrl.u32 %v815, 7
  %vm817 = vcmp.eq.s32.totalorder %v816, 0
  %vm818 = vcmp.eq.s32.totalorder %v349, 0
  %vm819 = vmand %vm817, %vm818
  %vm820 = vcmp.eq.s32.totalorder %v349, 1
  %vm821 = vmand %vm817, %vm820
  %v822 = vstv %s814
  %v823 = vsel %vm821, %v822, 0.0
  %v824 = vstv %s797
  %v825 = vsel %vm819, %v824, %v823
  %826 = vst [vmem:[%s5] sm:$0xff] %v825
  // Predicated region
  $region18: #{codebook_vq_forward.1} parent=0 // pred_check
    _
  $region19: #{codebook_vq_forward.1} parent=0 // pred_check_branch
    %828 = sbr.rel (0) target = $region21
  $region20: #{codebook_vq_forward.1} parent=0 // pred_region
    _
  $region21: #{codebook_vq_forward.1} parent=0 // pred_fallthru
    _
  // Predicated region
  $region22: #{codebook_vq_forward.1} parent=0 // pred_check
    _
  $region23: #{codebook_vq_forward.1} parent=0 // pred_check_branch
    %830 = sbr.rel (0) target = $region25
  $region24: #{codebook_vq_forward.1} parent=0 // pred_region
    _
  $region25: #{codebook_vq_forward.1} parent=0 // pred_fallthru
    _
  // Predicated region
  $region26: #{codebook_vq_forward.1} parent=0 // pred_check
    _
  $region27: #{codebook_vq_forward.1} parent=0 // pred_check_branch
    %832 = sbr.rel (0) target = $region29
  $region28: #{codebook_vq_forward.1} parent=0 // pred_region
    _
  $region29: #{codebook_vq_forward.1} parent=0 // pred_fallthru
    _
  // Predicated region
  $region30: #{codebook_vq_forward.1} parent=0 // pred_check
    _
  $region31: #{codebook_vq_forward.1} parent=0 // pred_check_branch
    %834 = sbr.rel (0) target = $region33
  $region32: #{codebook_vq_forward.1} parent=0 // pred_region
    _
  $region33: #{codebook_vq_forward.1} parent=0 // pred_fallthru
    _

</llo_original>
